<compile_context>
chip_gen: v6e
topology: v6e:2x2x1
jax: 0.10.0
libtpu: 0.0.40
codegen_flags: <defaults>
</compile_context>

<pallas_src>
import jax
import jax.numpy as jnp
import numpy as np
from jax.experimental import pallas as pl
from jax.experimental.pallas import tpu as pltpu


def _criterion_kernel(params_ref, pred_ref, targ_ref, out_ref):
    # params_ref: SMEM (4,)  -> [sax, saq, srx, srq]
    # pred_ref/targ_ref: VMEM (N, T, 6) in native dtype (f32 or bf16)
    # out_ref: SMEM (1, 1) float32
    sax = params_ref[0]
    saq = params_ref[1]
    srx = params_ref[2]
    srq = params_ref[3]

    pred = pred_ref[...].astype(jnp.float32)
    targ = targ_ref[...].astype(jnp.float32)
    N, T, D = pred.shape  # static at trace time

    # Compile-time reciprocal constants for the L1 means.
    inv_n_abs = jnp.float32(1.0 / (N * T * 3))
    inv_n_vo = jnp.float32(1.0 / (N * (T - 1) * 3))

    err = pred - targ

    # ---- absolute pose L1: one partial reduction, then t/q lane split ----
    abs_sum = jnp.sum(jnp.abs(err), axis=(0, 1), keepdims=True)  # (1,1,6)
    abs_t = jnp.sum(abs_sum[..., :3]) * inv_n_abs
    abs_q = jnp.sum(abs_sum[..., 3:]) * inv_n_abs

    # ---- relative (VO) poses: calc_vos_simple == p[:,1:] - p[:,:-1] ----
    # vos(pred) - vos(targ) == err[:,1:] - err[:,:-1]
    vo_err = err[:, 1:, :] - err[:, :-1, :]
    vo_sum = jnp.sum(jnp.abs(vo_err), axis=(0, 1), keepdims=True)  # (1,1,6)
    vo_t = jnp.sum(vo_sum[..., :3]) * inv_n_vo
    vo_q = jnp.sum(vo_sum[..., 3:]) * inv_n_vo

    # exp(-s) * L + s weighting; the four additive s-terms folded into one add.
    s_const = sax + saq + srx + srq
    loss = (jnp.exp(-sax) * abs_t + jnp.exp(-saq) * abs_q +
            jnp.exp(-srx) * vo_t + jnp.exp(-srq) * vo_q + s_const)

    out_ref[0, 0] = loss


def mapnet_criterion(pred, targ, sax=0.0, saq=0.0, srx=0.0, srq=0.0):
    """pred, targ: (N, T, 6) arrays (any float dtype). Returns scalar f32 loss."""
    params = jnp.array([sax, saq, srx, srq], dtype=jnp.float32)
    out = pl.pallas_call(
        _criterion_kernel,
        out_shape=jax.ShapeDtypeStruct((1, 1), jnp.float32),
        in_specs=[
            pl.BlockSpec(memory_space=pltpu.MemorySpace.SMEM),  # params
            pl.BlockSpec(memory_space=pltpu.MemorySpace.VMEM),  # pred (native dtype)
            pl.BlockSpec(memory_space=pltpu.MemorySpace.VMEM),  # targ (native dtype)
        ],
        out_specs=pl.BlockSpec(memory_space=pltpu.MemorySpace.SMEM),
    )(params, pred, targ)
    return out[0, 0]


def _reference(pred, targ, sax=0.0, saq=0.0, srx=0.0, srq=0.0):
    """Pure-JAX reference matching the PyTorch forward (L1Loss, reduction=mean)."""
    pred = pred.astype(jnp.float32)
    targ = targ.astype(jnp.float32)
    p2 = pred.reshape(-1, pred.shape[-1])
    t2 = targ.reshape(-1, targ.shape[-1])
    abs_loss = (jnp.exp(-sax) * jnp.mean(jnp.abs(p2[:, :3] - t2[:, :3])) + sax +
                jnp.exp(-saq) * jnp.mean(jnp.abs(p2[:, 3:] - t2[:, 3:])) + saq)
    pv = pred[:, 1:, :] - pred[:, :-1, :]
    tv = targ[:, 1:, :] - targ[:, :-1, :]
    pv2 = pv.reshape(-1, pv.shape[-1])
    tv2 = tv.reshape(-1, tv.shape[-1])
    vo_loss = (jnp.exp(-srx) * jnp.mean(jnp.abs(pv2[:, :3] - tv2[:, :3])) + srx +
               jnp.exp(-srq) * jnp.mean(jnp.abs(pv2[:, 3:] - tv2[:, 3:])) + srq)
    return abs_loss + vo_loss


if __name__ == "__main__":
    # Deterministic parameter init (module defaults): sax=saq=srx=srq=0.0
    sax, saq, srx, srq = 0.0, 0.0, 0.0, 0.0

    key = jax.random.PRNGKey(0)
    k1, k2 = jax.random.split(key)
    N, T = 2, 8            # N x T x 6 poses
    pred = jax.random.normal(k1, (N, T, 6), dtype=jnp.float32)
    targ = jax.random.normal(k2, (N, T, 6), dtype=jnp.float32)

    loss = mapnet_criterion(pred, targ, sax, saq, srx, srq)
    loss = jax.block_until_ready(loss)

    ref = jax.block_until_ready(_reference(pred, targ, sax, saq, srx, srq))
    np.testing.assert_allclose(np.asarray(loss), np.asarray(ref), rtol=1e-5, atol=1e-5)

    print("KERNEL_OK")
</pallas_src>

<mosaic_0001>
module attributes {stable_mosaic.version = 11 : i64} {
  func.func @_criterion_kernel(%arg0: memref<4xf32, #tpu.memory_space<smem>>, %arg1: memref<2x8x6xf32, #tpu.memory_space<vmem>>, %arg2: memref<2x8x6xf32, #tpu.memory_space<vmem>>, %arg3: memref<1x1xf32, #tpu.memory_space<smem>>) attributes {dimension_semantics = [], scalar_prefetch = 0 : i64, scratch_operands = 0 : i64, tpu.core_type = #tpu.core_type<tc>} {
    %c0 = arith.constant 0 : index
    %0 = memref.load %arg0[%c0] : memref<4xf32, #tpu.memory_space<smem>>
    %c1 = arith.constant 1 : index
    %1 = memref.load %arg0[%c1] : memref<4xf32, #tpu.memory_space<smem>>
    %c2 = arith.constant 2 : index
    %2 = memref.load %arg0[%c2] : memref<4xf32, #tpu.memory_space<smem>>
    %c3 = arith.constant 3 : index
    %3 = memref.load %arg0[%c3] : memref<4xf32, #tpu.memory_space<smem>>
    %c0_0 = arith.constant 0 : index
    %c0_1 = arith.constant 0 : index
    %c0_2 = arith.constant 0 : index
    %4 = vector.load %arg1[%c0_0, %c0_1, %c0_2] : memref<2x8x6xf32, #tpu.memory_space<vmem>>, vector<2x8x6xf32>
    %c0_3 = arith.constant 0 : index
    %c0_4 = arith.constant 0 : index
    %c0_5 = arith.constant 0 : index
    %5 = vector.load %arg2[%c0_3, %c0_4, %c0_5] : memref<2x8x6xf32, #tpu.memory_space<vmem>>, vector<2x8x6xf32>
    %6 = arith.subf %4, %5 : vector<2x8x6xf32>
    %7 = math.absf %6 : vector<2x8x6xf32>
    %cst = arith.constant dense<0.000000e+00> : vector<6xf32>
    %8 = vector.multi_reduction <add>, %7, %cst [0, 1] : vector<2x8x6xf32> to vector<6xf32>
    %9 = vector.shape_cast %8 : vector<6xf32> to vector<1x1x6xf32>
    %10 = vector.extract_strided_slice %9 {offsets = [0, 0, 0], sizes = [1, 1, 3], strides = [1, 1, 1]} : vector<1x1x6xf32> to vector<1x1x3xf32>
    %11 = vector.shape_cast %10 : vector<1x1x3xf32> to vector<1x1x1x3xf32>
    %cst_6 = arith.constant dense<0.000000e+00> : vector<1xf32>
    %12 = vector.multi_reduction <add>, %11, %cst_6 [1, 2, 3] : vector<1x1x1x3xf32> to vector<1xf32>
    %13 = vector.shape_cast %12 : vector<1xf32> to vector<1x1x1x1xf32>
    %14 = vector.extract %13[0, 0, 0, 0] : f32 from vector<1x1x1x1xf32>
    %cst_7 = arith.constant 0.020833334 : f32
    %15 = arith.mulf %14, %cst_7 : f32
    %16 = vector.extract_strided_slice %9 {offsets = [0, 0, 3], sizes = [1, 1, 3], strides = [1, 1, 1]} : vector<1x1x6xf32> to vector<1x1x3xf32>
    %17 = vector.shape_cast %16 : vector<1x1x3xf32> to vector<1x1x1x3xf32>
    %cst_8 = arith.constant dense<0.000000e+00> : vector<1xf32>
    %18 = vector.multi_reduction <add>, %17, %cst_8 [1, 2, 3] : vector<1x1x1x3xf32> to vector<1xf32>
    %19 = vector.shape_cast %18 : vector<1xf32> to vector<1x1x1x1xf32>
    %20 = vector.extract %19[0, 0, 0, 0] : f32 from vector<1x1x1x1xf32>
    %cst_9 = arith.constant 0.020833334 : f32
    %21 = arith.mulf %20, %cst_9 : f32
    %22 = vector.extract_strided_slice %6 {offsets = [0, 1, 0], sizes = [2, 7, 6], strides = [1, 1, 1]} : vector<2x8x6xf32> to vector<2x7x6xf32>
    %23 = vector.extract_strided_slice %6 {offsets = [0, 0, 0], sizes = [2, 7, 6], strides = [1, 1, 1]} : vector<2x8x6xf32> to vector<2x7x6xf32>
    %24 = arith.subf %22, %23 : vector<2x7x6xf32>
    %25 = math.absf %24 : vector<2x7x6xf32>
    %cst_10 = arith.constant dense<0.000000e+00> : vector<6xf32>
    %26 = vector.multi_reduction <add>, %25, %cst_10 [0, 1] : vector<2x7x6xf32> to vector<6xf32>
    %27 = vector.shape_cast %26 : vector<6xf32> to vector<1x1x6xf32>
    %28 = vector.extract_strided_slice %27 {offsets = [0, 0, 0], sizes = [1, 1, 3], strides = [1, 1, 1]} : vector<1x1x6xf32> to vector<1x1x3xf32>
    %29 = vector.shape_cast %28 : vector<1x1x3xf32> to vector<1x1x1x3xf32>
    %cst_11 = arith.constant dense<0.000000e+00> : vector<1xf32>
    %30 = vector.multi_reduction <add>, %29, %cst_11 [1, 2, 3] : vector<1x1x1x3xf32> to vector<1xf32>
    %31 = vector.shape_cast %30 : vector<1xf32> to vector<1x1x1x1xf32>
    %32 = vector.extract %31[0, 0, 0, 0] : f32 from vector<1x1x1x1xf32>
    %cst_12 = arith.constant 0.0238095243 : f32
    %33 = arith.mulf %32, %cst_12 : f32
    %34 = vector.extract_strided_slice %27 {offsets = [0, 0, 3], sizes = [1, 1, 3], strides = [1, 1, 1]} : vector<1x1x6xf32> to vector<1x1x3xf32>
    %35 = vector.shape_cast %34 : vector<1x1x3xf32> to vector<1x1x1x3xf32>
    %cst_13 = arith.constant dense<0.000000e+00> : vector<1xf32>
    %36 = vector.multi_reduction <add>, %35, %cst_13 [1, 2, 3] : vector<1x1x1x3xf32> to vector<1xf32>
    %37 = vector.shape_cast %36 : vector<1xf32> to vector<1x1x1x1xf32>
    %38 = vector.extract %37[0, 0, 0, 0] : f32 from vector<1x1x1x1xf32>
    %cst_14 = arith.constant 0.0238095243 : f32
    %39 = arith.mulf %38, %cst_14 : f32
    %40 = arith.addf %0, %1 : f32
    %41 = arith.addf %40, %2 : f32
    %42 = arith.addf %41, %3 : f32
    %cst_15 = arith.constant 0.000000e+00 : f32
    %43 = arith.subf %cst_15, %0 : f32
    %44 = math.exp %43 : f32
    %45 = arith.mulf %44, %15 : f32
    %cst_16 = arith.constant 0.000000e+00 : f32
    %46 = arith.subf %cst_16, %1 : f32
    %47 = math.exp %46 : f32
    %48 = arith.mulf %47, %21 : f32
    %49 = arith.addf %45, %48 : f32
    %cst_17 = arith.constant 0.000000e+00 : f32
    %50 = arith.subf %cst_17, %2 : f32
    %51 = math.exp %50 : f32
    %52 = arith.mulf %51, %33 : f32
    %53 = arith.addf %49, %52 : f32
    %cst_18 = arith.constant 0.000000e+00 : f32
    %54 = arith.subf %cst_18, %3 : f32
    %55 = math.exp %54 : f32
    %56 = arith.mulf %55, %39 : f32
    %57 = arith.addf %53, %56 : f32
    %58 = arith.addf %57, %42 : f32
    %c0_19 = arith.constant 0 : index
    %c0_20 = arith.constant 0 : index
    %59 = memref.load %arg3[%c0_19, %c0_20] : memref<1x1xf32, #tpu.memory_space<smem>>
    memref.store %58, %arg3[%c0_19, %c0_20] : memref<1x1xf32, #tpu.memory_space<smem>>
    return
  }
}

</mosaic_0001>

<llo_original>
// kernel: tpu_custom_call.1
$region0: #{tpu_custom_call.1}
  #allocation0 [shape = 'u32[]', space=smem, size = 0x4, offset = 0x4, fixed_abs, tag = 'smem constant byte address 0x4 - core index']
  #allocation1 [shape = 'u32[144,128]{1,0:T(1,128)}', space=vmem, size = 0x12000, scoped, tag = 'internal scratch']
  %s0 = inlined_call_operand.vmem [shape: f32[4], index: 0, kind: input, shape index: {}]
  %s1 = inlined_call_operand.vmem [shape: f32[2,8,6], index: 1, kind: input, shape index: {}]
  %s2 = inlined_call_operand.vmem [shape: f32[2,8,6], index: 2, kind: input, shape index: {}]
  %s3 = inlined_call_operand.hbm [shape: f32[1,1], index: 3, kind: output, shape index: {}]
  %s4 = sld [smem:[#allocation0]]
  $region26: #{tpu_custom_call.1} parent=0
    _
  %s6 = ssub.s32 1, %s4
  %s7 = scalar_select 0, %s6, %s4
  $region1: #{tpu_custom_call.1} parent=0
    #allocation2 [shape = 'u8[512]{0}', space=smem, size = 0x200, scoped, tag = 'input window, operand 0, single buffered']
    #allocation3 [shape = 's32[1]{0}', space=sflag, size = 0x4, scoped, tag = 'scoped memory for tpu_custom_call.1']
    #allocation4 [shape = 's32[1]{0}', space=sflag, size = 0x4, scoped, tag = 'scoped memory for tpu_custom_call.1']
    #allocation5 [shape = 'u8[512]{0}', space=smem, size = 0x200, scoped, tag = 'output window, operand 0, single buffered']
    %8 = vsyncpa [#allocation4], 0
    %9 = vsyncpa [#allocation3], 0
    // Predicated region
    $region2: #{tpu_custom_call.1} parent=1 // pred_check
      _
    $region3: #{tpu_custom_call.1} parent=1 // pred_check_branch
      %11 = sbr.rel (0) target = $region5
    $region4: #{tpu_custom_call.1} parent=1 // pred_region
      %s13 = ssub.s32 16, 16
      %14 = vsyncadd [#allocation4], %s13
      %s16 = sshll.u32 %s0, 4
      %s17 = int_to_ptr.vmem [resolvable:$true] %s16
      %19 = dma.vmem_to_smem %s17, 16, [#allocation2], [#allocation4]
    $region5: #{tpu_custom_call.1} parent=1 // pred_fallthru
      _
    // Predicated region
    $region6: #{tpu_custom_call.1} parent=1 // pred_check
      _
    $region7: #{tpu_custom_call.1} parent=1 // pred_check_branch
      %21 = sbr.rel (0) target = $region9
    $region8: #{tpu_custom_call.1} parent=1 // pred_region
      _
    $region9: #{tpu_custom_call.1} parent=1 // pred_fallthru
      _
    // Predicated region
    $region10: #{tpu_custom_call.1} parent=1 // pred_check
      _
    $region11: #{tpu_custom_call.1} parent=1 // pred_check_branch
      %23 = sbr.rel (0) target = $region13
    $region12: #{tpu_custom_call.1} parent=1 // pred_region
      _
    $region13: #{tpu_custom_call.1} parent=1 // pred_fallthru
      _
    // Predicated region
    $region14: #{tpu_custom_call.1} parent=1 // pred_check
      _
    $region15: #{tpu_custom_call.1} parent=1 // pred_check_branch
      %25 = sbr.rel (0) target = $region17
    $region16: #{tpu_custom_call.1} parent=1 // pred_region
      %26 = dma.done [#allocation4], 16
    $region17: #{tpu_custom_call.1} parent=1 // pred_fallthru
      _
    %27 = sfence
    %s28 = sld [smem:[#allocation2]]
    %s29 = sld [smem:[#allocation2 + $0x1]]
    %s30 = sld [smem:[#allocation2 + $0x2]]
    %s31 = sld [smem:[#allocation2 + $0x3]]
    %v32 = vld [vmem:[%s1] sm:$0xff]
    %v33 = vld [vmem:[%s1 + $0x8] sm:$0xff]
    %v34 = vld [vmem:[%s2] sm:$0xff]
    %v35 = vld [vmem:[%s2 + $0x8] sm:$0xff]
    %v36 = vsub.f32 %v32, %v34
    %v37 = vsub.f32 %v33, %v35
    %v38 = vand.u32 2147483647, %v36
    %v39 = vand.u32 2147483647, %v37
    %vm40 = vcmask 48128
    %v41 = vsel %vm40, %v38, 0.0
    %v42 = vsel %vm40, %v39, 0.0
    %v43 = vadd.f32 %v41, %v42
    %v44 = vrot.slane %v43, 4
    %v45 = vadd.f32 %v43, %v44
    %v46 = vrot.slane %v45, 2
    %v47 = vadd.f32 %v45, %v46
    %v48 = vrot.slane %v47, 1
    %v49 = vadd.f32 %v47, %v48
    %vm50 = vcmask 16384
    %v51 = vsel %vm50, %v49, 0.0
    %52 = vadd.xlane.f32.xlu0 %v51
    %v53 = vpop.xlane.xlu0 %52
    %v54 = vrot.slane %v53, 4
    %v55 = vadd.f32 %v53, %v54
    %v56 = vrot.slane %v55, 2
    %v57 = vadd.f32 %v55, %v56
    %v58 = vrot.slane %v57, 1
    %v59 = vadd.f32 %v57, %v58
    %s60 = vtos %v59
    %s61 = smul.f32 %s60, 0.020833334
    %63 = vrot.lane.b32.xlu0 %v49, 125
    %v64 = vpop.permute.xlu0 %63
    %v66 = vsel %vm50, %v64, 0.0
    %67 = vadd.xlane.f32.xlu0 %v66
    %v68 = vpop.xlane.xlu0 %67
    %v69 = vrot.slane %v68, 4
    %v70 = vadd.f32 %v68, %v69
    %v71 = vrot.slane %v70, 2
    %v72 = vadd.f32 %v70, %v71
    %v73 = vrot.slane %v72, 1
    %v74 = vadd.f32 %v72, %v73
    %s75 = vtos %v74
    %s76 = smul.f32 %s75, 0.020833334
    %v79 = vrot.slane %v36, 7
    %v80 = vrot.slane %v37, 7
    %v83 = vsub.f32 %v36, %v79
    %v84 = vsub.f32 %v37, %v80
    %v85 = vand.u32 2147483647, %v83
    %v86 = vand.u32 2147483647, %v84
    %v89 = vrot.slane %v85, 1
    %v90 = vrot.slane %v86, 1
    %vm93 = vcmask 47104
    %v94 = vsel %vm93, %v89, 0.0
    %v95 = vsel %vm93, %v90, 0.0
    %v96 = vadd.f32 %v94, %v95
    %v97 = vrot.slane %v96, 4
    %v98 = vadd.f32 %v96, %v97
    %v99 = vrot.slane %v98, 2
    %v100 = vadd.f32 %v98, %v99
    %v101 = vrot.slane %v100, 1
    %v102 = vadd.f32 %v100, %v101
    %v103 = vsel %vm50, %v102, 0.0
    %104 = vadd.xlane.f32.xlu0 %v103
    %v105 = vpop.xlane.xlu0 %104
    %v106 = vrot.slane %v105, 4
    %v107 = vadd.f32 %v105, %v106
    %v108 = vrot.slane %v107, 2
    %v109 = vadd.f32 %v107, %v108
    %v110 = vrot.slane %v109, 1
    %v111 = vadd.f32 %v109, %v110
    %s112 = vtos %v111
    %s113 = smul.f32 %s112, 0.023809524
    %115 = vrot.lane.b32.xlu0 %v102, 125
    %v116 = vpop.permute.xlu0 %115
    %v118 = vsel %vm50, %v116, 0.0
    %119 = vadd.xlane.f32.xlu0 %v118
    %v120 = vpop.xlane.xlu0 %119
    %v121 = vrot.slane %v120, 4
    %v122 = vadd.f32 %v120, %v121
    %v123 = vrot.slane %v122, 2
    %v124 = vadd.f32 %v122, %v123
    %v125 = vrot.slane %v124, 1
    %v126 = vadd.f32 %v124, %v125
    %s127 = vtos %v126
    %s128 = smul.f32 %s127, 0.023809524
    %s129 = sadd.f32 %s28, %s29
    %s130 = sadd.f32 %s129, %s30
    %s131 = sadd.f32 %s130, %s31
    %s132 = ssub.f32 0.0, %s28
    %v133 = vstv %s132
    %v134 = vmul.f32 %v133, 1.442695
    %v135 = vpow.pop %v134
    %s136 = vtos %v135
    %s137 = smul.f32 %s136, %s61
    %s138 = ssub.f32 0.0, %s29
    %v139 = vstv %s138
    %v140 = vmul.f32 %v139, 1.442695
    %v141 = vpow.pop %v140
    %s142 = vtos %v141
    %s143 = smul.f32 %s142, %s76
    %s144 = sadd.f32 %s137, %s143
    %s145 = ssub.f32 0.0, %s30
    %v146 = vstv %s145
    %v147 = vmul.f32 %v146, 1.442695
    %v148 = vpow.pop %v147
    %s149 = vtos %v148
    %s150 = smul.f32 %s149, %s113
    %s151 = sadd.f32 %s144, %s150
    %s152 = ssub.f32 0.0, %s31
    %v153 = vstv %s152
    %v154 = vmul.f32 %v153, 1.442695
    %v155 = vpow.pop %v154
    %s156 = vtos %v155
    %s157 = smul.f32 %s156, %s128
    %s158 = sadd.f32 %s151, %s157
    %s159 = sadd.f32 %s158, %s131
    %s160 = scalar_lea.smem [#allocation5], 0
    %161 = sst [smem:[%s160]] %s159
    // Predicated region
    $region18: #{tpu_custom_call.1} parent=1 // pred_check
      _
    $region19: #{tpu_custom_call.1} parent=1 // pred_check_branch
      %163 = sbr.rel (0) target = $region21
    $region20: #{tpu_custom_call.1} parent=1 // pred_region
      %s165 = ssub.s32 16, 16
      %166 = vsyncadd [#allocation3], %s165
      %169 = dma.smem_to_hbm [#allocation5], 16, %s3, [#allocation3]
    $region21: #{tpu_custom_call.1} parent=1 // pred_fallthru
      _
    // Predicated region
    $region22: #{tpu_custom_call.1} parent=1 // pred_check
      _
    $region23: #{tpu_custom_call.1} parent=1 // pred_check_branch
      %171 = sbr.rel (0) target = $region25
    $region24: #{tpu_custom_call.1} parent=1 // pred_region
      %172 = dma.done [#allocation3], 16
    $region25: #{tpu_custom_call.1} parent=1 // pred_fallthru
      _
    %173 = sfence
    %174 = vsyncpa [#allocation3], 1
    %175 = vsyncpa [#allocation4], 1

</llo_original>
